<compile_context>
chip_gen: v5e
topology: v5e:2x2
jax: 0.10.0
libtpu: 0.0.40
codegen_flags: <defaults>
</compile_context>

<pallas_src>
import math

import jax
import jax.numpy as jnp
from jax.experimental import pallas as pl
from jax.experimental.pallas import tpu as pltpu

_LANE = 128


def _sub_kernel(pred_ref, target_ref, out_ref):
    # Casts fused in-kernel (VPU has slack on this DMA-bound kernel); no-ops
    # when dtypes already match the output dtype.
    out_ref[...] = (pred_ref[...].astype(out_ref.dtype)
                    - target_ref[...].astype(out_ref.dtype))


def _pick_lanes(n, max_lanes):
    """Largest multiple of 128 that divides n, capped at max_lanes (0 if none)."""
    start = min(max_lanes, (n // _LANE) * _LANE)
    for cand in range(start, 0, -_LANE):
        if n % cand == 0:
            return cand
    return 0


def classification_loss(pred, target, logger=None, n_iter=None, *,
                        min_pallas_bytes=1 << 20,    # fast path below 1 MiB
                        target_tile_bytes=4 << 20,   # ~4 MiB tiles, ~24 MiB VMEM footprint
                        max_lanes=8192,
                        min_grid_steps=4):           # keep both v7x TCs busy + overlap
    """loss = pred - target, computed in a Pallas TPU kernel.

    `logger` and `n_iter` are accepted for signature parity but unused,
    exactly as in the reference module's math.
    """
    assert pred.shape == target.shape, "pred/target must have the same shape"
    orig_shape = pred.shape
    out_dtype = jnp.result_type(pred.dtype, target.dtype)
    out_itemsize = jnp.dtype(out_dtype).itemsize

    n = math.prod(orig_shape) if orig_shape else 1
    total_bytes = n * out_itemsize

    # Small-input fast path: pallas_call launch + pipeline prologue/epilogue
    # overhead vastly exceeds the work; XLA's fused elementwise is at roofline.
    if total_bytes < min_pallas_bytes:
        return pred - target

    lanes = _pick_lanes(n, max_lanes)
    if lanes == 0:
        # Element count not a multiple of 128: padding would add whole extra
        # HBM passes on a mem-bound op, so keep the fused XLA op instead.
        return pred - target

    rows = n // lanes

    # Sublane packing: 8 rows per f32 vreg, 16 for bf16/f16, 32 for int8/fp8.
    # Use the narrowest dtype among operands/output so blocks stay aligned to
    # packed-vreg boundaries for every array.
    min_itemsize = min(jnp.dtype(pred.dtype).itemsize,
                       jnp.dtype(target.dtype).itemsize,
                       out_itemsize)
    sublane_mult = 8 * max(1, 4 // min_itemsize)

    # Tile sizing: ~target_tile_bytes per output tile; 2 inputs + 1 output,
    # double-buffered ~= 6x tile bytes of VMEM (~24 MiB at 4 MiB tiles),
    # which fits the v7x 64 MiB VMEM ceiling with room to spare.
    block_rows = max(1, target_tile_bytes // (lanes * out_itemsize))
    block_rows = max((block_rows // sublane_mult) * sublane_mult, sublane_mult)

    # Guarantee >= min_grid_steps grid steps whenever rows allow, so the
    # "parallel" axis can shard across v7x's two TensorCores and the pipeline
    # overlaps read/compute/writeback even for medium-sized inputs.
    if rows >= min_grid_steps * sublane_mult:
        cap = (rows // min_grid_steps // sublane_mult) * sublane_mult
        block_rows = min(block_rows, max(cap, sublane_mult))
    if block_rows >= rows:
        block_rows = rows  # full-extent block dim is always layout-legal

    # Metadata-only reshape for contiguous inputs; NO dtype cast here (fused
    # into the kernel to avoid an extra HBM pass per converted operand).
    pred2d = pred.reshape(rows, lanes)
    target2d = target.reshape(rows, lanes)

    grid = (pl.cdiv(rows, block_rows),)
    pred_spec = pl.BlockSpec((block_rows, lanes), lambda i: (i, 0))
    target_spec = pl.BlockSpec((block_rows, lanes), lambda i: (i, 0))
    out_spec = pl.BlockSpec((block_rows, lanes), lambda i: (i, 0))

    out2d = pl.pallas_call(
        _sub_kernel,
        out_shape=jax.ShapeDtypeStruct((rows, lanes), out_dtype),
        grid_spec=pltpu.PrefetchScalarGridSpec(
            num_scalar_prefetch=0,
            grid=grid,
            in_specs=[pred_spec, target_spec],
            out_specs=out_spec,
        ),
        compiler_params=pltpu.CompilerParams(
            dimension_semantics=("parallel",),      # shard across TCs (v7x megacore)
            vmem_limit_bytes=48 * 1024 * 1024,      # > v5e 16 MiB default, < v7x 64 MiB phys
        ),
    )(pred2d, target2d)

    return out2d.reshape(orig_shape)


if __name__ == "__main__":
    key = jax.random.PRNGKey(0)
    k_pred, k_target, k_pred2, k_target2 = jax.random.split(key, 4)

    # 1) Module-consistent small shape (NCHW logits / feature map).
    #    Force the Pallas path (min_pallas_bytes=0) so the kernel is exercised.
    pred = jax.random.normal(k_pred, (2, 4, 16, 16), dtype=jnp.float32)
    target = jax.random.normal(k_target, (2, 4, 16, 16), dtype=jnp.float32)

    loss = classification_loss(pred, target, logger=None, n_iter=0,
                               min_pallas_bytes=0)
    loss = jax.block_until_ready(loss)
    ref = pred - target
    assert loss.shape == ref.shape and loss.dtype == ref.dtype
    assert jnp.allclose(loss, ref, atol=0.0, rtol=0.0)

    # 2) Mixed-dtype path: cast is fused into the kernel (no wrapper astype).
    target_bf16 = target.astype(jnp.bfloat16)
    loss_mixed = classification_loss(pred, target_bf16, logger=None, n_iter=0,
                                     min_pallas_bytes=0)
    loss_mixed = jax.block_until_ready(loss_mixed)
    ref_mixed = pred - target_bf16
    assert loss_mixed.dtype == ref_mixed.dtype
    assert jnp.allclose(loss_mixed, ref_mixed, atol=0.0, rtol=0.0)

    # 3) Larger input exercising the multi-block path with the >=4-step
    #    grid guarantee (rows=128, lanes=8192, block_rows=32 -> grid=(4,)).
    pred_l = jax.random.normal(k_pred2, (4, 8, 128, 256), dtype=jnp.float32)
    target_l = jax.random.normal(k_target2, (4, 8, 128, 256), dtype=jnp.float32)
    loss_l = classification_loss(pred_l, target_l, logger=None, n_iter=0)
    loss_l = jax.block_until_ready(loss_l)
    assert jnp.allclose(loss_l, pred_l - target_l, atol=0.0, rtol=0.0)

    # 4) Fast path sanity check (default threshold routes tiny inputs to XLA).
    loss_fast = jax.block_until_ready(
        classification_loss(pred, target, logger=None, n_iter=0))
    assert jnp.allclose(loss_fast, ref, atol=0.0, rtol=0.0)

    print("KERNEL_OK")
</pallas_src>

<mosaic_0001>
module attributes {stable_mosaic.version = 11 : i64} {
  func.func @_sub_kernel(%arg0: i32, %arg1: memref<1x2048xf32, #tpu.memory_space<vmem>>, %arg2: memref<1x2048xf32, #tpu.memory_space<vmem>>, %arg3: memref<1x2048xf32, #tpu.memory_space<vmem>>) attributes {dimension_semantics = [#tpu.dimension_semantics<parallel>], iteration_bounds = array<i64: 1>, scalar_prefetch = 0 : i64, scratch_operands = 0 : i64, tpu.core_type = #tpu.core_type<tc>, window_params = [{transform_indices = @transform_0, window_bounds = array<i64: 1, 2048>}, {transform_indices = @transform_1, window_bounds = array<i64: 1, 2048>}, {transform_indices = @transform_2, window_bounds = array<i64: 1, 2048>}]} {
    %c0 = arith.constant 0 : index
    %c0_0 = arith.constant 0 : index
    %0 = vector.load %arg1[%c0, %c0_0] : memref<1x2048xf32, #tpu.memory_space<vmem>>, vector<1x2048xf32>
    %c0_1 = arith.constant 0 : index
    %c0_2 = arith.constant 0 : index
    %1 = vector.load %arg2[%c0_1, %c0_2] : memref<1x2048xf32, #tpu.memory_space<vmem>>, vector<1x2048xf32>
    %2 = arith.subf %0, %1 : vector<1x2048xf32>
    %c0_3 = arith.constant 0 : index
    %c0_4 = arith.constant 0 : index
    %3 = vector.load %arg3[%c0_3, %c0_4] : memref<1x2048xf32, #tpu.memory_space<vmem>>, vector<1x2048xf32>
    tpu.vector_store %arg3[%c0_3, %c0_4], %2 {strides = array<i32>} : memref<1x2048xf32, #tpu.memory_space<vmem>>, vector<1x2048xf32>,
    return
  }
  func.func @transform_0(%arg0: i32) -> (i32, i32) {
    %c0_i32 = arith.constant 0 : i32
    %c0_i32_0 = arith.constant 0 : i32
    return %arg0, %c0_i32 : i32, i32
  }
  func.func @transform_1(%arg0: i32) -> (i32, i32) {
    %c0_i32 = arith.constant 0 : i32
    %c0_i32_0 = arith.constant 0 : i32
    return %arg0, %c0_i32 : i32, i32
  }
  func.func @transform_2(%arg0: i32) -> (i32, i32) {
    %c0_i32 = arith.constant 0 : i32
    %c0_i32_0 = arith.constant 0 : i32
    return %arg0, %c0_i32 : i32, i32
  }
}

</mosaic_0001>

<llo_original>
// kernel: tpu_custom_call.1
$region0: #{tpu_custom_call.1}
  #allocation0 [shape = 'u32[]', space=smem, size = 0x4, offset = 0x4, fixed_abs, tag = 'smem constant byte address 0x4 - core index']
  #allocation1 [shape = 'u32[72,128]{1,0:T(1,128)}', space=vmem, size = 0x9000, scoped, tag = 'internal scratch']
  %s0 = inlined_call_operand.hbm [shape: f32[1,2048], index: 0, kind: input, shape index: {}]
  %s1 = inlined_call_operand.hbm [shape: f32[1,2048], index: 1, kind: input, shape index: {}]
  %s2 = inlined_call_operand.hbm [shape: f32[1,2048], index: 2, kind: output, shape index: {}]
  %s3 = sld [smem:[#allocation0]]
  $region26: #{tpu_custom_call.1} parent=0
    _
  %s5 = ssub.s32 1, %s3
  %s6 = scalar_select 0, %s5, %s3
  $region1: #{tpu_custom_call.1} parent=0
    #allocation2 [shape = 'u8[8192]{0}', space=vmem, size = 0x2000, scoped, tag = 'input window, operand 0, single buffered']
    #allocation3 [shape = 's32[1]{0}', space=sflag, size = 0x4, scoped, tag = 'scoped memory for tpu_custom_call.1']
    #allocation4 [shape = 's32[1]{0}', space=sflag, size = 0x4, scoped, tag = 'scoped memory for tpu_custom_call.1']
    #allocation5 [shape = 'u8[8192]{0}', space=vmem, size = 0x2000, scoped, tag = 'input window, operand 1, single buffered']
    #allocation6 [shape = 's32[1]{0}', space=sflag, size = 0x4, scoped, tag = 'scoped memory for tpu_custom_call.1']
    #allocation7 [shape = 'u8[8192]{0}', space=vmem, size = 0x2000, scoped, tag = 'output window, operand 0, single buffered']
    %7 = vsyncpa [#allocation3], 0
    %8 = vsyncpa [#allocation6], 0
    %9 = vsyncpa [#allocation4], 0
    // Predicated region
    $region2: #{tpu_custom_call.1} parent=1 // pred_check
      _
    $region3: #{tpu_custom_call.1} parent=1 // pred_check_branch
      %11 = sbr.rel (0) target = $region5
    $region4: #{tpu_custom_call.1} parent=1 // pred_region
      %13 = vsyncadd [#allocation3], 0
      %s15 = sshll.u32 %s0, 4
      %s16 = int_to_ptr.hbm [resolvable:$true] %s15
      %s17 = sshll.u32 [#allocation2], 4
      %s18 = int_to_ptr.vmem [resolvable:$true] %s17
      %20 = dma.hbm_to_vmem [thread:$0]  %s16, 256, %s18, [#allocation3]
    $region5: #{tpu_custom_call.1} parent=1 // pred_fallthru
      _
    // Predicated region
    $region6: #{tpu_custom_call.1} parent=1 // pred_check
      _
    $region7: #{tpu_custom_call.1} parent=1 // pred_check_branch
      %22 = sbr.rel (0) target = $region9
    $region8: #{tpu_custom_call.1} parent=1 // pred_region
      %24 = vsyncadd [#allocation6], 0
      %s26 = sshll.u32 %s1, 4
      %s27 = int_to_ptr.hbm [resolvable:$true] %s26
      %s28 = sshll.u32 [#allocation5], 4
      %s29 = int_to_ptr.vmem [resolvable:$true] %s28
      %31 = dma.hbm_to_vmem [thread:$0]  %s27, 256, %s29, [#allocation6]
    $region9: #{tpu_custom_call.1} parent=1 // pred_fallthru
      _
    // Predicated region
    $region10: #{tpu_custom_call.1} parent=1 // pred_check
      _
    $region11: #{tpu_custom_call.1} parent=1 // pred_check_branch
      %33 = sbr.rel (0) target = $region13
    $region12: #{tpu_custom_call.1} parent=1 // pred_region
      %35 = dma.done [#allocation3], 256
    $region13: #{tpu_custom_call.1} parent=1 // pred_fallthru
      _
    // Predicated region
    $region14: #{tpu_custom_call.1} parent=1 // pred_check
      _
    $region15: #{tpu_custom_call.1} parent=1 // pred_check_branch
      %37 = sbr.rel (0) target = $region17
    $region16: #{tpu_custom_call.1} parent=1 // pred_region
      %39 = dma.done [#allocation6], 256
    $region17: #{tpu_custom_call.1} parent=1 // pred_fallthru
      _
    %v40 = vld [vmem:[#allocation2] sm:$0xff]
    %v41 = vld [vmem:[#allocation2 + $0x8] sm:$0xff]
    %v42 = vld [vmem:[#allocation5] sm:$0xff]
    %v43 = vld [vmem:[#allocation5 + $0x8] sm:$0xff]
    %v44 = vsub.f32 %v40, %v42
    %v45 = vsub.f32 %v41, %v43
    %46 = vst [vmem:[#allocation7] sm:$0xff] %v44
    %47 = vst [vmem:[#allocation7 + $0x8] sm:$0xff] %v45
    // Predicated region
    $region18: #{tpu_custom_call.1} parent=1 // pred_check
      _
    $region19: #{tpu_custom_call.1} parent=1 // pred_check_branch
      %49 = sbr.rel (0) target = $region21
    $region20: #{tpu_custom_call.1} parent=1 // pred_region
      %51 = vsyncadd [#allocation4], 0
      %s53 = sshll.u32 [#allocation7], 4
      %s54 = int_to_ptr.vmem [resolvable:$true] %s53
      %s55 = sshll.u32 %s2, 4
      %s56 = int_to_ptr.hbm [resolvable:$true] %s55
      %58 = dma.vmem_to_hbm [thread:$0]  %s54, 256, %s56, [#allocation4]
    $region21: #{tpu_custom_call.1} parent=1 // pred_fallthru
      _
    // Predicated region
    $region22: #{tpu_custom_call.1} parent=1 // pred_check
      _
    $region23: #{tpu_custom_call.1} parent=1 // pred_check_branch
      %60 = sbr.rel (0) target = $region25
    $region24: #{tpu_custom_call.1} parent=1 // pred_region
      %62 = dma.done [#allocation4], 256
    $region25: #{tpu_custom_call.1} parent=1 // pred_fallthru
      _
    %63 = vsyncpa [#allocation3], 1
    %64 = vsyncpa [#allocation6], 1
    %65 = vsyncpa [#allocation4], 1

</llo_original>
